<compile_context>
chip_gen: v7x
topology: tpu7x:2x2x1
jax: 0.10.0
libtpu: 0.0.40
codegen_flags: <defaults>
</compile_context>

<pallas_src>
import jax
import jax.numpy as jnp
import numpy as np
from jax.experimental import pallas as pl
from jax.experimental.pallas import tpu as pltpu


def _round_up(x, m):
    return ((x + m - 1) // m) * m


def _pose_kernel(rt_ref, p_ref, out_ref):
    # rt_ref: (6, TN)  rows = rx, ry, rz, tx, ty, tz
    # p_ref : (16, TN) rows = row-major flattened input pose
    # out_ref: (16, TN)
    rx = rt_ref[0:1, :]
    ry = rt_ref[1:2, :]
    rz = rt_ref[2:3, :]
    tx = rt_ref[3:4, :]
    ty = rt_ref[4:5, :]
    tz = rt_ref[5:6, :]

    theta = jnp.sqrt(rx * rx + ry * ry + rz * rz)          # (1, TN)
    safe = jnp.maximum(theta, 1e-8)
    inv = pl.reciprocal(safe, approx=False)                 # one EUP recip, not 3 divides
    kx = rx * inv
    ky = ry * inv
    kz = rz * inv

    s = jnp.sin(theta)
    c = jnp.cos(theta)
    oc = 1.0 - c

    # Hoist shared products (Mosaic may not CSE them).
    kxky_oc = kx * ky * oc
    kxkz_oc = kx * kz * oc
    kykz_oc = ky * kz * oc
    kxs = kx * s
    kys = ky * s
    kzs = kz * s

    # Rodrigues: R = I + sin(theta) K + (1 - cos(theta)) K^2
    R00 = c + kx * kx * oc
    R01 = kxky_oc - kzs
    R02 = kxkz_oc + kys
    R10 = kxky_oc + kzs
    R11 = c + ky * ky * oc
    R12 = kykz_oc - kxs
    R20 = kxkz_oc - kys
    R21 = kykz_oc + kxs
    R22 = c + kz * kz * oc

    R = ((R00, R01, R02), (R10, R11, R12), (R20, R21, R22))
    trans = (tx, ty, tz)

    p = p_ref[...]                                           # (16, TN)

    # out[4*i + j] = sum_k delta[i, k] * poses[k, j]   (delta row 3 = [0,0,0,1])
    for i in range(3):
        Ri0, Ri1, Ri2 = R[i]
        ti = trans[i]
        for j in range(4):
            out_ref[4 * i + j: 4 * i + j + 1, :] = (
                Ri0 * p[j:j + 1, :]
                + Ri1 * p[4 + j:5 + j, :]
                + Ri2 * p[8 + j:9 + j, :]
                + ti * p[12 + j:13 + j, :]
            )
    out_ref[12:16, :] = p[12:16, :]                          # bottom row passthrough


def camera_pose_forward(r, t, poses, *, tn=512):
    """r, t: (N, 3) float32; poses: (N, 4, 4) float32 -> (N, 4, 4) float32."""
    n = poses.shape[0]

    # Camera-tile size: multiple of 128, clamped so tiny N uses one 128-wide tile.
    tn = min(tn, _round_up(n, 128))
    n_pad = _round_up(n, tn)

    # SoA, lane-dense packing (done once in the wrapper, outside the kernel).
    rt = jnp.concatenate([r, t], axis=1).astype(jnp.float32).T          # (6, N)
    p_soa = poses.astype(jnp.float32).reshape(n, 16).T                  # (16, N)
    if n_pad != n:
        pad = n_pad - n
        rt = jnp.pad(rt, ((0, 0), (0, pad)))
        p_soa = jnp.pad(p_soa, ((0, 0), (0, pad)))

    out_soa = pl.pallas_call(
        _pose_kernel,
        out_shape=jax.ShapeDtypeStruct((16, n_pad), jnp.float32),
        grid=(n_pad // tn,),
        in_specs=[
            pl.BlockSpec((6, tn), lambda i: (0, i)),
            pl.BlockSpec((16, tn), lambda i: (0, i)),
        ],
        out_specs=pl.BlockSpec((16, tn), lambda i: (0, i)),
        compiler_params=pltpu.CompilerParams(
            dimension_semantics=("parallel",)),                         # v7x: 2 TCs
    )(rt, p_soa)

    return out_soa[:, :n].T.reshape(n, 4, 4)


def _reference(r, t, poses):
    # Pure-JAX reference for validation.
    theta = jnp.linalg.norm(r, axis=-1, keepdims=True)
    safe = jnp.maximum(theta, 1e-8)
    k = r / safe
    kx, ky, kz = k[:, 0], k[:, 1], k[:, 2]
    s = jnp.sin(theta)[:, 0]
    c = jnp.cos(theta)[:, 0]
    oc = 1.0 - c
    R = jnp.stack([
        jnp.stack([c + kx * kx * oc, kx * ky * oc - kz * s, kx * kz * oc + ky * s], -1),
        jnp.stack([ky * kx * oc + kz * s, c + ky * ky * oc, ky * kz * oc - kx * s], -1),
        jnp.stack([kz * kx * oc - ky * s, kz * ky * oc + kx * s, c + kz * kz * oc], -1),
    ], axis=1)                                             # (N, 3, 3)
    n = r.shape[0]
    delta = jnp.tile(jnp.eye(4, dtype=jnp.float32)[None], (n, 1, 1))
    delta = delta.at[:, :3, :3].set(R)
    delta = delta.at[:, :3, 3].set(t)
    return jnp.einsum("nij,njk->nik", delta, poses)


if __name__ == "__main__":
    key = jax.random.PRNGKey(0)
    k_pose, k_r, k_t, k_pose2, k_r2, k_t2 = jax.random.split(key, 6)

    # --- Parameter setup mirroring CameraPoseModel.__init__ (num_cams = 8) ---
    num_cams = 8
    poses = jax.random.normal(k_pose, (num_cams, 4, 4), dtype=jnp.float32)
    poses = poses.at[:, 3, :].set(jnp.array([0.0, 0.0, 0.0, 1.0], dtype=jnp.float32))
    r_zero = jnp.zeros((num_cams, 3), dtype=jnp.float32)
    t_zero = jnp.zeros((num_cams, 3), dtype=jnp.float32)

    # Forward with init-time parameter values (r = t = 0 -> delta = identity).
    out0 = jax.block_until_ready(camera_pose_forward(r_zero, t_zero, poses))
    assert np.allclose(np.asarray(out0), np.asarray(poses), atol=1e-5), \
        "identity-delta check failed"

    # Exercise the Rodrigues path with non-trivial r, t against the JAX reference.
    r = 0.3 * jax.random.normal(k_r, (num_cams, 3), dtype=jnp.float32)
    t = 0.5 * jax.random.normal(k_t, (num_cams, 3), dtype=jnp.float32)
    out = jax.block_until_ready(camera_pose_forward(r, t, poses))
    ref = jax.block_until_ready(_reference(r, t, poses))
    assert np.allclose(np.asarray(out), np.asarray(ref), atol=1e-5), \
        "Rodrigues/matmul check failed"

    # Larger, non-multiple-of-128 camera count with a multi-step grid (tn=128)
    # to exercise padding + pipelined tiles.
    n2 = 300
    poses2 = jax.random.normal(k_pose2, (n2, 4, 4), dtype=jnp.float32)
    poses2 = poses2.at[:, 3, :].set(jnp.array([0.0, 0.0, 0.0, 1.0], dtype=jnp.float32))
    r2 = 0.3 * jax.random.normal(k_r2, (n2, 3), dtype=jnp.float32)
    t2 = 0.5 * jax.random.normal(k_t2, (n2, 3), dtype=jnp.float32)
    out2 = jax.block_until_ready(camera_pose_forward(r2, t2, poses2, tn=128))
    ref2 = jax.block_until_ready(_reference(r2, t2, poses2))
    assert np.allclose(np.asarray(out2), np.asarray(ref2), atol=1e-5), \
        "tiled-grid check failed"

    print("KERNEL_OK")
</pallas_src>

<mosaic_0001>
module attributes {stable_mosaic.version = 11 : i64} {
  func.func @_pose_kernel(%arg0: i32, %arg1: memref<6x128xf32, #tpu.memory_space<vmem>>, %arg2: memref<16x128xf32, #tpu.memory_space<vmem>>, %arg3: memref<16x128xf32, #tpu.memory_space<vmem>>) attributes {dimension_semantics = [#tpu.dimension_semantics<parallel>], iteration_bounds = array<i64: 1>, scalar_prefetch = 0 : i64, scratch_operands = 0 : i64, tpu.core_type = #tpu.core_type<tc>, window_params = [{transform_indices = @transform_0, window_bounds = array<i64: 6, 128>}, {transform_indices = @transform_1, window_bounds = array<i64: 16, 128>}, {transform_indices = @transform_2, window_bounds = array<i64: 16, 128>}]} {
    %c0 = arith.constant 0 : index
    %c0_0 = arith.constant 0 : index
    %0 = vector.load %arg1[%c0, %c0_0] : memref<6x128xf32, #tpu.memory_space<vmem>>, vector<1x128xf32>
    %c1 = arith.constant 1 : index
    %c0_1 = arith.constant 0 : index
    %1 = vector.load %arg1[%c1, %c0_1] : memref<6x128xf32, #tpu.memory_space<vmem>>, vector<1x128xf32>
    %c2 = arith.constant 2 : index
    %c0_2 = arith.constant 0 : index
    %2 = vector.load %arg1[%c2, %c0_2] : memref<6x128xf32, #tpu.memory_space<vmem>>, vector<1x128xf32>
    %c3 = arith.constant 3 : index
    %c0_3 = arith.constant 0 : index
    %3 = vector.load %arg1[%c3, %c0_3] : memref<6x128xf32, #tpu.memory_space<vmem>>, vector<1x128xf32>
    %c4 = arith.constant 4 : index
    %c0_4 = arith.constant 0 : index
    %4 = vector.load %arg1[%c4, %c0_4] : memref<6x128xf32, #tpu.memory_space<vmem>>, vector<1x128xf32>
    %c5 = arith.constant 5 : index
    %c0_5 = arith.constant 0 : index
    %5 = vector.load %arg1[%c5, %c0_5] : memref<6x128xf32, #tpu.memory_space<vmem>>, vector<1x128xf32>
    %6 = arith.mulf %0, %0 : vector<1x128xf32>
    %7 = arith.mulf %1, %1 : vector<1x128xf32>
    %8 = arith.addf %6, %7 : vector<1x128xf32>
    %9 = arith.mulf %2, %2 : vector<1x128xf32>
    %10 = arith.addf %8, %9 : vector<1x128xf32>
    %11 = math.sqrt %10 : vector<1x128xf32>
    %cst = arith.constant 9.99999993E-9 : f32
    %12 = vector.broadcast %cst : f32 to vector<1x128xf32>
    %13 = arith.maximumf %11, %12 : vector<1x128xf32>
    %14 = tpu.reciprocal %13 : vector<1x128xf32> -> vector<1x128xf32>
    %15 = arith.mulf %0, %14 : vector<1x128xf32>
    %16 = arith.mulf %1, %14 : vector<1x128xf32>
    %17 = arith.mulf %2, %14 : vector<1x128xf32>
    %18 = math.sin %11 : vector<1x128xf32>
    %19 = math.cos %11 : vector<1x128xf32>
    %cst_6 = arith.constant 1.000000e+00 : f32
    %20 = vector.broadcast %cst_6 : f32 to vector<1x128xf32>
    %21 = arith.subf %20, %19 : vector<1x128xf32>
    %22 = arith.mulf %15, %16 : vector<1x128xf32>
    %23 = arith.mulf %22, %21 : vector<1x128xf32>
    %24 = arith.mulf %15, %17 : vector<1x128xf32>
    %25 = arith.mulf %24, %21 : vector<1x128xf32>
    %26 = arith.mulf %16, %17 : vector<1x128xf32>
    %27 = arith.mulf %26, %21 : vector<1x128xf32>
    %28 = arith.mulf %15, %18 : vector<1x128xf32>
    %29 = arith.mulf %16, %18 : vector<1x128xf32>
    %30 = arith.mulf %17, %18 : vector<1x128xf32>
    %31 = arith.mulf %15, %15 : vector<1x128xf32>
    %32 = arith.mulf %31, %21 : vector<1x128xf32>
    %33 = arith.addf %19, %32 : vector<1x128xf32>
    %34 = arith.subf %23, %30 : vector<1x128xf32>
    %35 = arith.addf %25, %29 : vector<1x128xf32>
    %36 = arith.addf %23, %30 : vector<1x128xf32>
    %37 = arith.mulf %16, %16 : vector<1x128xf32>
    %38 = arith.mulf %37, %21 : vector<1x128xf32>
    %39 = arith.addf %19, %38 : vector<1x128xf32>
    %40 = arith.subf %27, %28 : vector<1x128xf32>
    %41 = arith.subf %25, %29 : vector<1x128xf32>
    %42 = arith.addf %27, %28 : vector<1x128xf32>
    %43 = arith.mulf %17, %17 : vector<1x128xf32>
    %44 = arith.mulf %43, %21 : vector<1x128xf32>
    %45 = arith.addf %19, %44 : vector<1x128xf32>
    %c0_7 = arith.constant 0 : index
    %c0_8 = arith.constant 0 : index
    %46 = vector.load %arg2[%c0_7, %c0_8] : memref<16x128xf32, #tpu.memory_space<vmem>>, vector<16x128xf32>
    %47 = vector.extract_strided_slice %46 {offsets = [0, 0], sizes = [1, 128], strides = [1, 1]} : vector<16x128xf32> to vector<1x128xf32>
    %48 = arith.mulf %33, %47 : vector<1x128xf32>
    %49 = vector.extract_strided_slice %46 {offsets = [4, 0], sizes = [1, 128], strides = [1, 1]} : vector<16x128xf32> to vector<1x128xf32>
    %50 = arith.mulf %34, %49 : vector<1x128xf32>
    %51 = arith.addf %48, %50 : vector<1x128xf32>
    %52 = vector.extract_strided_slice %46 {offsets = [8, 0], sizes = [1, 128], strides = [1, 1]} : vector<16x128xf32> to vector<1x128xf32>
    %53 = arith.mulf %35, %52 : vector<1x128xf32>
    %54 = arith.addf %51, %53 : vector<1x128xf32>
    %55 = vector.extract_strided_slice %46 {offsets = [12, 0], sizes = [1, 128], strides = [1, 1]} : vector<16x128xf32> to vector<1x128xf32>
    %56 = arith.mulf %3, %55 : vector<1x128xf32>
    %57 = arith.addf %54, %56 : vector<1x128xf32>
    %c0_9 = arith.constant 0 : index
    %c0_10 = arith.constant 0 : index
    %58 = vector.load %arg3[%c0_9, %c0_10] : memref<16x128xf32, #tpu.memory_space<vmem>>, vector<1x128xf32>
    tpu.vector_store %arg3[%c0_9, %c0_10], %57 {strides = array<i32>} : memref<16x128xf32, #tpu.memory_space<vmem>>, vector<1x128xf32>,
    %59 = vector.extract_strided_slice %46 {offsets = [1, 0], sizes = [1, 128], strides = [1, 1]} : vector<16x128xf32> to vector<1x128xf32>
    %60 = arith.mulf %33, %59 : vector<1x128xf32>
    %61 = vector.extract_strided_slice %46 {offsets = [5, 0], sizes = [1, 128], strides = [1, 1]} : vector<16x128xf32> to vector<1x128xf32>
    %62 = arith.mulf %34, %61 : vector<1x128xf32>
    %63 = arith.addf %60, %62 : vector<1x128xf32>
    %64 = vector.extract_strided_slice %46 {offsets = [9, 0], sizes = [1, 128], strides = [1, 1]} : vector<16x128xf32> to vector<1x128xf32>
    %65 = arith.mulf %35, %64 : vector<1x128xf32>
    %66 = arith.addf %63, %65 : vector<1x128xf32>
    %67 = vector.extract_strided_slice %46 {offsets = [13, 0], sizes = [1, 128], strides = [1, 1]} : vector<16x128xf32> to vector<1x128xf32>
    %68 = arith.mulf %3, %67 : vector<1x128xf32>
    %69 = arith.addf %66, %68 : vector<1x128xf32>
    %c1_11 = arith.constant 1 : index
    %c0_12 = arith.constant 0 : index
    %70 = vector.load %arg3[%c1_11, %c0_12] : memref<16x128xf32, #tpu.memory_space<vmem>>, vector<1x128xf32>
    tpu.vector_store %arg3[%c1_11, %c0_12], %69 {strides = array<i32>} : memref<16x128xf32, #tpu.memory_space<vmem>>, vector<1x128xf32>,
    %71 = vector.extract_strided_slice %46 {offsets = [2, 0], sizes = [1, 128], strides = [1, 1]} : vector<16x128xf32> to vector<1x128xf32>
    %72 = arith.mulf %33, %71 : vector<1x128xf32>
    %73 = vector.extract_strided_slice %46 {offsets = [6, 0], sizes = [1, 128], strides = [1, 1]} : vector<16x128xf32> to vector<1x128xf32>
    %74 = arith.mulf %34, %73 : vector<1x128xf32>
    %75 = arith.addf %72, %74 : vector<1x128xf32>
    %76 = vector.extract_strided_slice %46 {offsets = [10, 0], sizes = [1, 128], strides = [1, 1]} : vector<16x128xf32> to vector<1x128xf32>
    %77 = arith.mulf %35, %76 : vector<1x128xf32>
    %78 = arith.addf %75, %77 : vector<1x128xf32>
    %79 = vector.extract_strided_slice %46 {offsets = [14, 0], sizes = [1, 128], strides = [1, 1]} : vector<16x128xf32> to vector<1x128xf32>
    %80 = arith.mulf %3, %79 : vector<1x128xf32>
    %81 = arith.addf %78, %80 : vector<1x128xf32>
    %c2_13 = arith.constant 2 : index
    %c0_14 = arith.constant 0 : index
    %82 = vector.load %arg3[%c2_13, %c0_14] : memref<16x128xf32, #tpu.memory_space<vmem>>, vector<1x128xf32>
    tpu.vector_store %arg3[%c2_13, %c0_14], %81 {strides = array<i32>} : memref<16x128xf32, #tpu.memory_space<vmem>>, vector<1x128xf32>,
    %83 = vector.extract_strided_slice %46 {offsets = [3, 0], sizes = [1, 128], strides = [1, 1]} : vector<16x128xf32> to vector<1x128xf32>
    %84 = arith.mulf %33, %83 : vector<1x128xf32>
    %85 = vector.extract_strided_slice %46 {offsets = [7, 0], sizes = [1, 128], strides = [1, 1]} : vector<16x128xf32> to vector<1x128xf32>
    %86 = arith.mulf %34, %85 : vector<1x128xf32>
    %87 = arith.addf %84, %86 : vector<1x128xf32>
    %88 = vector.extract_strided_slice %46 {offsets = [11, 0], sizes = [1, 128], strides = [1, 1]} : vector<16x128xf32> to vector<1x128xf32>
    %89 = arith.mulf %35, %88 : vector<1x128xf32>
    %90 = arith.addf %87, %89 : vector<1x128xf32>
    %91 = vector.extract_strided_slice %46 {offsets = [15, 0], sizes = [1, 128], strides = [1, 1]} : vector<16x128xf32> to vector<1x128xf32>
    %92 = arith.mulf %3, %91 : vector<1x128xf32>
    %93 = arith.addf %90, %92 : vector<1x128xf32>
    %c3_15 = arith.constant 3 : index
    %c0_16 = arith.constant 0 : index
    %94 = vector.load %arg3[%c3_15, %c0_16] : memref<16x128xf32, #tpu.memory_space<vmem>>, vector<1x128xf32>
    tpu.vector_store %arg3[%c3_15, %c0_16], %93 {strides = array<i32>} : memref<16x128xf32, #tpu.memory_space<vmem>>, vector<1x128xf32>,
    %95 = vector.extract_strided_slice %46 {offsets = [0, 0], sizes = [1, 128], strides = [1, 1]} : vector<16x128xf32> to vector<1x128xf32>
    %96 = arith.mulf %36, %95 : vector<1x128xf32>
    %97 = vector.extract_strided_slice %46 {offsets = [4, 0], sizes = [1, 128], strides = [1, 1]} : vector<16x128xf32> to vector<1x128xf32>
    %98 = arith.mulf %39, %97 : vector<1x128xf32>
    %99 = arith.addf %96, %98 : vector<1x128xf32>
    %100 = vector.extract_strided_slice %46 {offsets = [8, 0], sizes = [1, 128], strides = [1, 1]} : vector<16x128xf32> to vector<1x128xf32>
    %101 = arith.mulf %40, %100 : vector<1x128xf32>
    %102 = arith.addf %99, %101 : vector<1x128xf32>
    %103 = vector.extract_strided_slice %46 {offsets = [12, 0], sizes = [1, 128], strides = [1, 1]} : vector<16x128xf32> to vector<1x128xf32>
    %104 = arith.mulf %4, %103 : vector<1x128xf32>
    %105 = arith.addf %102, %104 : vector<1x128xf32>
    %c4_17 = arith.constant 4 : index
    %c0_18 = arith.constant 0 : index
    %106 = vector.load %arg3[%c4_17, %c0_18] : memref<16x128xf32, #tpu.memory_space<vmem>>, vector<1x128xf32>
    tpu.vector_store %arg3[%c4_17, %c0_18], %105 {strides = array<i32>} : memref<16x128xf32, #tpu.memory_space<vmem>>, vector<1x128xf32>,
    %107 = vector.extract_strided_slice %46 {offsets = [1, 0], sizes = [1, 128], strides = [1, 1]} : vector<16x128xf32> to vector<1x128xf32>
    %108 = arith.mulf %36, %107 : vector<1x128xf32>
    %109 = vector.extract_strided_slice %46 {offsets = [5, 0], sizes = [1, 128], strides = [1, 1]} : vector<16x128xf32> to vector<1x128xf32>
    %110 = arith.mulf %39, %109 : vector<1x128xf32>
    %111 = arith.addf %108, %110 : vector<1x128xf32>
    %112 = vector.extract_strided_slice %46 {offsets = [9, 0], sizes = [1, 128], strides = [1, 1]} : vector<16x128xf32> to vector<1x128xf32>
    %113 = arith.mulf %40, %112 : vector<1x128xf32>
    %114 = arith.addf %111, %113 : vector<1x128xf32>
    %115 = vector.extract_strided_slice %46 {offsets = [13, 0], sizes = [1, 128], strides = [1, 1]} : vector<16x128xf32> to vector<1x128xf32>
    %116 = arith.mulf %4, %115 : vector<1x128xf32>
    %117 = arith.addf %114, %116 : vector<1x128xf32>
    %c5_19 = arith.constant 5 : index
    %c0_20 = arith.constant 0 : index
    %118 = vector.load %arg3[%c5_19, %c0_20] : memref<16x128xf32, #tpu.memory_space<vmem>>, vector<1x128xf32>
    tpu.vector_store %arg3[%c5_19, %c0_20], %117 {strides = array<i32>} : memref<16x128xf32, #tpu.memory_space<vmem>>, vector<1x128xf32>,
    %119 = vector.extract_strided_slice %46 {offsets = [2, 0], sizes = [1, 128], strides = [1, 1]} : vector<16x128xf32> to vector<1x128xf32>
    %120 = arith.mulf %36, %119 : vector<1x128xf32>
    %121 = vector.extract_strided_slice %46 {offsets = [6, 0], sizes = [1, 128], strides = [1, 1]} : vector<16x128xf32> to vector<1x128xf32>
    %122 = arith.mulf %39, %121 : vector<1x128xf32>
    %123 = arith.addf %120, %122 : vector<1x128xf32>
    %124 = vector.extract_strided_slice %46 {offsets = [10, 0], sizes = [1, 128], strides = [1, 1]} : vector<16x128xf32> to vector<1x128xf32>
    %125 = arith.mulf %40, %124 : vector<1x128xf32>
    %126 = arith.addf %123, %125 : vector<1x128xf32>
    %127 = vector.extract_strided_slice %46 {offsets = [14, 0], sizes = [1, 128], strides = [1, 1]} : vector<16x128xf32> to vector<1x128xf32>
    %128 = arith.mulf %4, %127 : vector<1x128xf32>
    %129 = arith.addf %126, %128 : vector<1x128xf32>
    %c6 = arith.constant 6 : index
    %c0_21 = arith.constant 0 : index
    %130 = vector.load %arg3[%c6, %c0_21] : memref<16x128xf32, #tpu.memory_space<vmem>>, vector<1x128xf32>
    tpu.vector_store %arg3[%c6, %c0_21], %129 {strides = array<i32>} : memref<16x128xf32, #tpu.memory_space<vmem>>, vector<1x128xf32>,
    %131 = vector.extract_strided_slice %46 {offsets = [3, 0], sizes = [1, 128], strides = [1, 1]} : vector<16x128xf32> to vector<1x128xf32>
    %132 = arith.mulf %36, %131 : vector<1x128xf32>
    %133 = vector.extract_strided_slice %46 {offsets = [7, 0], sizes = [1, 128], strides = [1, 1]} : vector<16x128xf32> to vector<1x128xf32>
    %134 = arith.mulf %39, %133 : vector<1x128xf32>
    %135 = arith.addf %132, %134 : vector<1x128xf32>
    %136 = vector.extract_strided_slice %46 {offsets = [11, 0], sizes = [1, 128], strides = [1, 1]} : vector<16x128xf32> to vector<1x128xf32>
    %137 = arith.mulf %40, %136 : vector<1x128xf32>
    %138 = arith.addf %135, %137 : vector<1x128xf32>
    %139 = vector.extract_strided_slice %46 {offsets = [15, 0], sizes = [1, 128], strides = [1, 1]} : vector<16x128xf32> to vector<1x128xf32>
    %140 = arith.mulf %4, %139 : vector<1x128xf32>
    %141 = arith.addf %138, %140 : vector<1x128xf32>
    %c7 = arith.constant 7 : index
    %c0_22 = arith.constant 0 : index
    %142 = vector.load %arg3[%c7, %c0_22] : memref<16x128xf32, #tpu.memory_space<vmem>>, vector<1x128xf32>
    tpu.vector_store %arg3[%c7, %c0_22], %141 {strides = array<i32>} : memref<16x128xf32, #tpu.memory_space<vmem>>, vector<1x128xf32>,
    %143 = vector.extract_strided_slice %46 {offsets = [0, 0], sizes = [1, 128], strides = [1, 1]} : vector<16x128xf32> to vector<1x128xf32>
    %144 = arith.mulf %41, %143 : vector<1x128xf32>
    %145 = vector.extract_strided_slice %46 {offsets = [4, 0], sizes = [1, 128], strides = [1, 1]} : vector<16x128xf32> to vector<1x128xf32>
    %146 = arith.mulf %42, %145 : vector<1x128xf32>
    %147 = arith.addf %144, %146 : vector<1x128xf32>
    %148 = vector.extract_strided_slice %46 {offsets = [8, 0], sizes = [1, 128], strides = [1, 1]} : vector<16x128xf32> to vector<1x128xf32>
    %149 = arith.mulf %45, %148 : vector<1x128xf32>
    %150 = arith.addf %147, %149 : vector<1x128xf32>
    %151 = vector.extract_strided_slice %46 {offsets = [12, 0], sizes = [1, 128], strides = [1, 1]} : vector<16x128xf32> to vector<1x128xf32>
    %152 = arith.mulf %5, %151 : vector<1x128xf32>
    %153 = arith.addf %150, %152 : vector<1x128xf32>
    %c8 = arith.constant 8 : index
    %c0_23 = arith.constant 0 : index
    %154 = vector.load %arg3[%c8, %c0_23] : memref<16x128xf32, #tpu.memory_space<vmem>>, vector<1x128xf32>
    tpu.vector_store %arg3[%c8, %c0_23], %153 {strides = array<i32>} : memref<16x128xf32, #tpu.memory_space<vmem>>, vector<1x128xf32>,
    %155 = vector.extract_strided_slice %46 {offsets = [1, 0], sizes = [1, 128], strides = [1, 1]} : vector<16x128xf32> to vector<1x128xf32>
    %156 = arith.mulf %41, %155 : vector<1x128xf32>
    %157 = vector.extract_strided_slice %46 {offsets = [5, 0], sizes = [1, 128], strides = [1, 1]} : vector<16x128xf32> to vector<1x128xf32>
    %158 = arith.mulf %42, %157 : vector<1x128xf32>
    %159 = arith.addf %156, %158 : vector<1x128xf32>
    %160 = vector.extract_strided_slice %46 {offsets = [9, 0], sizes = [1, 128], strides = [1, 1]} : vector<16x128xf32> to vector<1x128xf32>
    %161 = arith.mulf %45, %160 : vector<1x128xf32>
    %162 = arith.addf %159, %161 : vector<1x128xf32>
    %163 = vector.extract_strided_slice %46 {offsets = [13, 0], sizes = [1, 128], strides = [1, 1]} : vector<16x128xf32> to vector<1x128xf32>
    %164 = arith.mulf %5, %163 : vector<1x128xf32>
    %165 = arith.addf %162, %164 : vector<1x128xf32>
    %c9 = arith.constant 9 : index
    %c0_24 = arith.constant 0 : index
    %166 = vector.load %arg3[%c9, %c0_24] : memref<16x128xf32, #tpu.memory_space<vmem>>, vector<1x128xf32>
    tpu.vector_store %arg3[%c9, %c0_24], %165 {strides = array<i32>} : memref<16x128xf32, #tpu.memory_space<vmem>>, vector<1x128xf32>,
    %167 = vector.extract_strided_slice %46 {offsets = [2, 0], sizes = [1, 128], strides = [1, 1]} : vector<16x128xf32> to vector<1x128xf32>
    %168 = arith.mulf %41, %167 : vector<1x128xf32>
    %169 = vector.extract_strided_slice %46 {offsets = [6, 0], sizes = [1, 128], strides = [1, 1]} : vector<16x128xf32> to vector<1x128xf32>
    %170 = arith.mulf %42, %169 : vector<1x128xf32>
    %171 = arith.addf %168, %170 : vector<1x128xf32>
    %172 = vector.extract_strided_slice %46 {offsets = [10, 0], sizes = [1, 128], strides = [1, 1]} : vector<16x128xf32> to vector<1x128xf32>
    %173 = arith.mulf %45, %172 : vector<1x128xf32>
    %174 = arith.addf %171, %173 : vector<1x128xf32>
    %175 = vector.extract_strided_slice %46 {offsets = [14, 0], sizes = [1, 128], strides = [1, 1]} : vector<16x128xf32> to vector<1x128xf32>
    %176 = arith.mulf %5, %175 : vector<1x128xf32>
    %177 = arith.addf %174, %176 : vector<1x128xf32>
    %c10 = arith.constant 10 : index
    %c0_25 = arith.constant 0 : index
    %178 = vector.load %arg3[%c10, %c0_25] : memref<16x128xf32, #tpu.memory_space<vmem>>, vector<1x128xf32>
    tpu.vector_store %arg3[%c10, %c0_25], %177 {strides = array<i32>} : memref<16x128xf32, #tpu.memory_space<vmem>>, vector<1x128xf32>,
    %179 = vector.extract_strided_slice %46 {offsets = [3, 0], sizes = [1, 128], strides = [1, 1]} : vector<16x128xf32> to vector<1x128xf32>
    %180 = arith.mulf %41, %179 : vector<1x128xf32>
    %181 = vector.extract_strided_slice %46 {offsets = [7, 0], sizes = [1, 128], strides = [1, 1]} : vector<16x128xf32> to vector<1x128xf32>
    %182 = arith.mulf %42, %181 : vector<1x128xf32>
    %183 = arith.addf %180, %182 : vector<1x128xf32>
    %184 = vector.extract_strided_slice %46 {offsets = [11, 0], sizes = [1, 128], strides = [1, 1]} : vector<16x128xf32> to vector<1x128xf32>
    %185 = arith.mulf %45, %184 : vector<1x128xf32>
    %186 = arith.addf %183, %185 : vector<1x128xf32>
    %187 = vector.extract_strided_slice %46 {offsets = [15, 0], sizes = [1, 128], strides = [1, 1]} : vector<16x128xf32> to vector<1x128xf32>
    %188 = arith.mulf %5, %187 : vector<1x128xf32>
    %189 = arith.addf %186, %188 : vector<1x128xf32>
    %c11 = arith.constant 11 : index
    %c0_26 = arith.constant 0 : index
    %190 = vector.load %arg3[%c11, %c0_26] : memref<16x128xf32, #tpu.memory_space<vmem>>, vector<1x128xf32>
    tpu.vector_store %arg3[%c11, %c0_26], %189 {strides = array<i32>} : memref<16x128xf32, #tpu.memory_space<vmem>>, vector<1x128xf32>,
    %191 = vector.extract_strided_slice %46 {offsets = [12, 0], sizes = [4, 128], strides = [1, 1]} : vector<16x128xf32> to vector<4x128xf32>
    %c12 = arith.constant 12 : index
    %c0_27 = arith.constant 0 : index
    %192 = vector.load %arg3[%c12, %c0_27] : memref<16x128xf32, #tpu.memory_space<vmem>>, vector<4x128xf32>
    tpu.vector_store %arg3[%c12, %c0_27], %191 {strides = array<i32>} : memref<16x128xf32, #tpu.memory_space<vmem>>, vector<4x128xf32>,
    return
  }
  func.func @transform_0(%arg0: i32) -> (i32, i32) {
    %c0_i32 = arith.constant 0 : i32
    %c0_i32_0 = arith.constant 0 : i32
    return %c0_i32, %arg0 : i32, i32
  }
  func.func @transform_1(%arg0: i32) -> (i32, i32) {
    %c0_i32 = arith.constant 0 : i32
    %c0_i32_0 = arith.constant 0 : i32
    return %c0_i32, %arg0 : i32, i32
  }
  func.func @transform_2(%arg0: i32) -> (i32, i32) {
    %c0_i32 = arith.constant 0 : i32
    %c0_i32_0 = arith.constant 0 : i32
    return %c0_i32, %arg0 : i32, i32
  }
}

</mosaic_0001>

<llo_original>
// kernel: tpu_custom_call.1
$region0: #{tpu_custom_call.1}
  #allocation0 [shape = 'u32[]', space=smem, size = 0x4, offset = 0x4, fixed_abs, tag = 'smem constant byte address 0x4 - core index']
  #allocation1 [shape = 'u32[144,128]{1,0:T(1,128)}', space=vmem, size = 0x12000, scoped, tag = 'internal scratch']
  %s0 = inlined_call_operand.hbm [shape: f32[6,128], index: 0, kind: input, shape index: {}]
  %s1 = inlined_call_operand.hbm [shape: f32[16,128], index: 1, kind: input, shape index: {}]
  %s2 = inlined_call_operand.hbm [shape: f32[16,128], index: 2, kind: output, shape index: {}]
  %s3 = sld [smem:[#allocation0]]
  $region26: #{tpu_custom_call.1} parent=0
    _
  %s5 = ssub.s32 1, %s3
  %s6 = scalar_select 0, %s5, %s3
  $region1: #{tpu_custom_call.1} parent=0
    #allocation2 [shape = 'u8[4096]{0}', space=vmem, size = 0x1000, scoped, tag = 'input window, operand 0, single buffered']
    #allocation3 [shape = 's32[1]{0}', space=sflag, size = 0x4, scoped, tag = 'scoped memory for tpu_custom_call.1']
    #allocation4 [shape = 's32[1]{0}', space=sflag, size = 0x4, scoped, tag = 'scoped memory for tpu_custom_call.1']
    #allocation5 [shape = 'u8[8192]{0}', space=vmem, size = 0x2000, scoped, tag = 'input window, operand 1, single buffered']
    #allocation6 [shape = 's32[1]{0}', space=sflag, size = 0x4, scoped, tag = 'scoped memory for tpu_custom_call.1']
    #allocation7 [shape = 'u8[8192]{0}', space=vmem, size = 0x2000, scoped, tag = 'output window, operand 0, single buffered']
    %7 = vsyncpa [#allocation3], 0
    %8 = vsyncpa [#allocation6], 0
    %9 = vsyncpa [#allocation4], 0
    // Predicated region
    $region2: #{tpu_custom_call.1} parent=1 // pred_check
      _
    $region3: #{tpu_custom_call.1} parent=1 // pred_check_branch
      %11 = sbr.rel (0) target = $region5
    $region4: #{tpu_custom_call.1} parent=1 // pred_region
      %s13 = ssub.s32 128, 128
      %14 = vsyncadd [#allocation3], %s13
      %s16 = sshll.u32 [#allocation2], 4
      %s17 = int_to_ptr.vmem [resolvable:$true] %s16
      %19 = dma.hbm_to_vmem [thread:$0]  %s0, 128, %s17, [#allocation3]
    $region5: #{tpu_custom_call.1} parent=1 // pred_fallthru
      _
    // Predicated region
    $region6: #{tpu_custom_call.1} parent=1 // pred_check
      _
    $region7: #{tpu_custom_call.1} parent=1 // pred_check_branch
      %21 = sbr.rel (0) target = $region9
    $region8: #{tpu_custom_call.1} parent=1 // pred_region
      %s23 = ssub.s32 256, 256
      %24 = vsyncadd [#allocation6], %s23
      %s25 = sshll.u32 [#allocation5], 4
      %s26 = int_to_ptr.vmem [resolvable:$true] %s25
      %31 = dma.hbm_to_vmem [thread:$0]  %s1, 256, %s26, [#allocation6], 128, 128, 8
    $region9: #{tpu_custom_call.1} parent=1 // pred_fallthru
      _
    // Predicated region
    $region10: #{tpu_custom_call.1} parent=1 // pred_check
      _
    $region11: #{tpu_custom_call.1} parent=1 // pred_check_branch
      %33 = sbr.rel (0) target = $region13
    $region12: #{tpu_custom_call.1} parent=1 // pred_region
      %34 = dma.done [#allocation3], 128
    $region13: #{tpu_custom_call.1} parent=1 // pred_fallthru
      _
    // Predicated region
    $region14: #{tpu_custom_call.1} parent=1 // pred_check
      _
    $region15: #{tpu_custom_call.1} parent=1 // pred_check_branch
      %36 = sbr.rel (0) target = $region17
    $region16: #{tpu_custom_call.1} parent=1 // pred_region
      %37 = dma.done [#allocation6], 256
    $region17: #{tpu_custom_call.1} parent=1 // pred_fallthru
      _
    %v38 = vld [vmem:[#allocation2] sm:$0x1]
    %v39 = vld [vmem:[#allocation2 + $0x1] sm:$0x1]
    %v40 = vld [vmem:[#allocation2 + $0x2] sm:$0x1]
    %v41 = vld [vmem:[#allocation2 + $0x3] sm:$0x1]
    %v42 = vld [vmem:[#allocation2 + $0x4] sm:$0x1]
    %v43 = vld [vmem:[#allocation2 + $0x5] sm:$0x1]
    %v44 = vmul.f32 %v38, %v38
    %v45 = vmul.f32 %v39, %v39
    %v46 = vadd.f32 %v44, %v45
    %v47 = vmul.f32 %v40, %v40
    %v48 = vadd.f32 %v46, %v47
    %v49 = vrsqrt.pop %v48
    %v50 = vmul.f32 %v48, %v49
    %vm51 = vcmp.eq.f32.partialorder %v48, inf
    %v52 = vsel %vm51, %v48, %v50
    %vm53 = vcmp.eq.f32.partialorder %v48, 0.0
    %v54 = vand.u32 %v48, 2147483648
    %v55 = vsel %vm53, %v54, %v52
    %v56 = vmax.f32 %v55, 1e-08
    %v57 = vrcp.pop %v56
    %v58 = vmul.f32 %v38, %v57
    %v59 = vmul.f32 %v39, %v57
    %v60 = vmul.f32 %v40, %v57
    %v61 = vand.u32 2147483647, %v55
    %vm62 = vcmp.le.f32.partialorder %v61, 0.7853982
    %vm63 = vcmp.lt.s32.totalorder %v55, 0
    %v64 = vand.u32 %v55, 2139095040
    %v65 = vshrl.u32 %v64, 23
    %v66 = vsub.s32 %v65, 127
    %v67 = vand.u32 2147483647, %v55
    %v68 = vand.u32 %v67, 8388607
    %v69 = vor.u32 %v68, 8388608
    %v70 = vsub.s32 0, %v69
    %v71 = vadd.s32 %v66, 1
    %vm72 = vcmp.gt.s32.totalorder %v71, 0
    %v73 = vsel %vm72, %v71, 0
    %v74 = vshrl.u32 %v73, 5
    %v75 = vand.u32 %v73, 31
    %v76 = vsub.s32 32, %v75
    %v77 = vshrl.u32 683565275, %v76
    %v78 = vshll.u32 683565275, %v75
    %v79 = vshrl.u32 2475754826, %v76
    %v80 = vor.u32 %v78, %v79
    %v81 = vshll.u32 2475754826, %v75
    %v82 = vshrl.u32 2131351028, %v76
    %v83 = vor.u32 %v81, %v82
    %v84 = vshll.u32 2131351028, %v75
    %v85 = vshrl.u32 2102212464, %v76
    %v86 = vor.u32 %v84, %v85
    %v87 = vshll.u32 2102212464, %v75
    %v88 = vshrl.u32 920167782, %v76
    %v89 = vor.u32 %v87, %v88
    %v90 = vshll.u32 920167782, %v75
    %v91 = vshrl.u32 1326507024, %v76
    %v92 = vor.u32 %v90, %v91
    %vm93 = vcmp.lt.s32.totalorder %v74, 1
    %vm94 = vcmp.lt.s32.totalorder %v74, 2
    %vm95 = vcmp.lt.s32.totalorder %v74, 3
    %vm96 = vcmp.lt.s32.totalorder %v74, 4
    %v97 = vsel %vm93, %v77, %v80
    %v98 = vsel %vm96, %v86, 2102212464
    %v99 = vsel %vm95, %v83, %v98
    %v100 = vsel %vm94, %v97, %v99
    %v101 = vsel %vm93, %v80, %v83
    %v102 = vsel %vm96, %v89, 920167782
    %v103 = vsel %vm95, %v86, %v102
    %v104 = vsel %vm94, %v101, %v103
    %v105 = vsel %vm93, %v83, %v86
    %v106 = vsel %vm96, %v92, 1326507024
    %v107 = vsel %vm95, %v89, %v106
    %v108 = vsel %vm94, %v105, %v107
    %v109 = vshll.u32 %v69, 8
    %v110 = vmul.u32.u64.compose %v109, %v108
    %v111 = vextract.low.u32 %v110
    %v112 = vextract.high.u32 %v110
    %v113 = vmul.u32.u64.compose %v109, %v104
    %v114 = vextract.low.u32 %v113
    %v115 = vextract.high.u32 %v113
    %v116 = vmul.u32 %v109, %v100
    %v117 = vadd.s32 %v112, %v114
    %vm118 = vc.u32 %v112, %v114
    %v119 = vadd.s32 %v115, 1
    %v120 = vsel %vm118, %v119, %v115
    %v121 = vadd.s32 %v116, %v120
    %v122 = vadd.s32 %v121, 536870912
    %v123 = vshrl.u32 %v122, 30
    %v124 = vshll.u32 %v123, 30
    %v125 = vsub.s32 %v121, %v124
    %vm126 = vcmp.lt.s32.totalorder %v125, 0
    %v127 = vsub.s32 0, %v125
    %v128 = vsel %vm126, %v127, %v125
    %v129 = vclz %v128
    %v130 = vsub.s32 %v129, 2
    %vm131 = vcmp.gt.s32.totalorder 0, %v130
    %v132 = vsel %vm131, 0, %v130
    %v133 = vsub.s32 32, %v132
    %v134 = vshll.u32 %v125, %v132
    %v135 = vshrl.u32 %v117, %v133
    %v136 = vor.u32 %v134, %v135
    %v137 = vsub.s32 4294967266, %v132
    %v138 = vadd.s32 %v137, 127
    %v139 = vshll.u32 %v138, 23
    %v140 = vor.u32 4788187, %v139
    %v141 = vand.u32 2147483647, %v140
    %v143 = vcvt.s32.f32 %v136
    %v144 = vmul.f32 %v143, %v141
    %v145 = vxor.u32 %v144, 2147483648
    %v146 = vsel %vm63, %v145, %v144
    %v147 = vsub.s32 4, %v123
    %v148 = vsel %vm63, %v147, %v123
    %v149 = vsel %vm62, %v55, %v146
    %v150 = vsel %vm62, 0, %v148
    %v151 = vcosq.f32.pop %v149
    %v152 = vsinq.f32.pop %v149
    %vm153 = vweird.f32 %v55
    %v154 = vadd.s32 %v150, 3
    %v155 = vand.u32 %v154, 3
    %vm156 = vcmp.lt.s32.totalorder %v155, 2
    %vm157 = vcmp.eq.s32.totalorder %v155, 0
    %v158 = vxor.u32 %v152, 2147483648
    %v159 = vsel %vm157, %v151, %v158
    %vm160 = vcmp.eq.s32.totalorder %v155, 2
    %v161 = vxor.u32 %v151, 2147483648
    %v162 = vsel %vm160, %v161, %v152
    %v163 = vsel %vm156, %v159, %v162
    %v164 = vsel %vm153, nan, %v163
    %v165 = vand.u32 2147483647, %v55
    %vm166 = vcmp.le.f32.partialorder %v165, 0.7853982
    %vm167 = vcmp.lt.s32.totalorder %v55, 0
    %v168 = vand.u32 %v55, 2139095040
    %v169 = vshrl.u32 %v168, 23
    %v170 = vsub.s32 %v169, 127
    %v171 = vand.u32 2147483647, %v55
    %v172 = vand.u32 %v171, 8388607
    %v173 = vor.u32 %v172, 8388608
    %v174 = vsub.s32 0, %v173
    %v175 = vadd.s32 %v170, 1
    %vm176 = vcmp.gt.s32.totalorder %v175, 0
    %v177 = vsel %vm176, %v175, 0
    %v178 = vshrl.u32 %v177, 5
    %v179 = vand.u32 %v177, 31
    %v180 = vsub.s32 32, %v179
    %v181 = vshrl.u32 683565275, %v180
    %v182 = vshll.u32 683565275, %v179
    %v183 = vshrl.u32 2475754826, %v180
    %v184 = vor.u32 %v182, %v183
    %v185 = vshll.u32 2475754826, %v179
    %v186 = vshrl.u32 2131351028, %v180
    %v187 = vor.u32 %v185, %v186
    %v188 = vshll.u32 2131351028, %v179
    %v189 = vshrl.u32 2102212464, %v180
    %v190 = vor.u32 %v188, %v189
    %v191 = vshll.u32 2102212464, %v179
    %v192 = vshrl.u32 920167782, %v180
    %v193 = vor.u32 %v191, %v192
    %v194 = vshll.u32 920167782, %v179
    %v195 = vshrl.u32 1326507024, %v180
    %v196 = vor.u32 %v194, %v195
    %vm197 = vcmp.lt.s32.totalorder %v178, 1
    %vm198 = vcmp.lt.s32.totalorder %v178, 2
    %vm199 = vcmp.lt.s32.totalorder %v178, 3
    %vm200 = vcmp.lt.s32.totalorder %v178, 4
    %v201 = vsel %vm197, %v181, %v184
    %v202 = vsel %vm200, %v190, 2102212464
    %v203 = vsel %vm199, %v187, %v202
    %v204 = vsel %vm198, %v201, %v203
    %v205 = vsel %vm197, %v184, %v187
    %v206 = vsel %vm200, %v193, 920167782
    %v207 = vsel %vm199, %v190, %v206
    %v208 = vsel %vm198, %v205, %v207
    %v209 = vsel %vm197, %v187, %v190
    %v210 = vsel %vm200, %v196, 1326507024
    %v211 = vsel %vm199, %v193, %v210
    %v212 = vsel %vm198, %v209, %v211
    %v213 = vshll.u32 %v173, 8
    %v214 = vmul.u32.u64.compose %v213, %v212
    %v215 = vextract.low.u32 %v214
    %v216 = vextract.high.u32 %v214
    %v217 = vmul.u32.u64.compose %v213, %v208
    %v218 = vextract.low.u32 %v217
    %v219 = vextract.high.u32 %v217
    %v220 = vmul.u32 %v213, %v204
    %v221 = vadd.s32 %v216, %v218
    %vm222 = vc.u32 %v216, %v218
    %v223 = vadd.s32 %v219, 1
    %v224 = vsel %vm222, %v223, %v219
    %v225 = vadd.s32 %v220, %v224
    %v226 = vadd.s32 %v225, 536870912
    %v227 = vshrl.u32 %v226, 30
    %v228 = vshll.u32 %v227, 30
    %v229 = vsub.s32 %v225, %v228
    %vm230 = vcmp.lt.s32.totalorder %v229, 0
    %v231 = vsub.s32 0, %v229
    %v232 = vsel %vm230, %v231, %v229
    %v233 = vclz %v232
    %v234 = vsub.s32 %v233, 2
    %vm235 = vcmp.gt.s32.totalorder 0, %v234
    %v236 = vsel %vm235, 0, %v234
    %v237 = vsub.s32 32, %v236
    %v238 = vshll.u32 %v229, %v236
    %v239 = vshrl.u32 %v221, %v237
    %v240 = vor.u32 %v238, %v239
    %v241 = vsub.s32 4294967266, %v236
    %v242 = vadd.s32 %v241, 127
    %v243 = vshll.u32 %v242, 23
    %v244 = vor.u32 4788187, %v243
    %v245 = vand.u32 2147483647, %v244
    %v247 = vcvt.s32.f32 %v240
    %v248 = vmul.f32 %v247, %v245
    %v249 = vxor.u32 %v248, 2147483648
    %v250 = vsel %vm167, %v249, %v248
    %v251 = vsub.s32 4, %v227
    %v252 = vsel %vm167, %v251, %v227
    %v253 = vsel %vm166, %v55, %v250
    %v254 = vsel %vm166, 0, %v252
    %v255 = vcosq.f32.pop %v253
    %v256 = vsinq.f32.pop %v253
    %vm257 = vweird.f32 %v55
    %v258 = vand.u32 %v254, 3
    %vm259 = vcmp.lt.s32.totalorder %v258, 2
    %vm260 = vcmp.eq.s32.totalorder %v258, 0
    %v261 = vxor.u32 %v256, 2147483648
    %v262 = vsel %vm260, %v255, %v261
    %vm263 = vcmp.eq.s32.totalorder %v258, 2
    %v264 = vxor.u32 %v255, 2147483648
    %v265 = vsel %vm263, %v264, %v256
    %v266 = vsel %vm259, %v262, %v265
    %v267 = vsel %vm257, nan, %v266
    %v268 = vsub.f32 1.0, %v267
    %v269 = vmul.f32 %v58, %v59
    %v270 = vmul.f32 %v269, %v268
    %v271 = vmul.f32 %v58, %v60
    %v272 = vmul.f32 %v271, %v268
    %v273 = vmul.f32 %v59, %v60
    %v274 = vmul.f32 %v273, %v268
    %v275 = vmul.f32 %v58, %v164
    %v276 = vmul.f32 %v59, %v164
    %v277 = vmul.f32 %v60, %v164
    %v278 = vmul.f32 %v58, %v58
    %v279 = vmul.f32 %v278, %v268
    %v280 = vadd.f32 %v267, %v279
    %v281 = vsub.f32 %v270, %v277
    %v282 = vadd.f32 %v272, %v276
    %v283 = vadd.f32 %v270, %v277
    %v284 = vmul.f32 %v59, %v59
    %v285 = vmul.f32 %v284, %v268
    %v286 = vadd.f32 %v267, %v285
    %v287 = vsub.f32 %v274, %v275
    %v288 = vsub.f32 %v272, %v276
    %v289 = vadd.f32 %v274, %v275
    %v290 = vmul.f32 %v60, %v60
    %v291 = vmul.f32 %v290, %v268
    %v292 = vadd.f32 %v267, %v291
    %v293 = vld [vmem:[#allocation5] sm:$0xff]
    %v294 = vld [vmem:[#allocation5 + $0x8] sm:$0xff]
    %v295 = vmul.f32 %v280, %v293
    %v297 = vrot.slane %v293, 4
    %v299 = vmul.f32 %v281, %v297
    %v300 = vadd.f32 %v295, %v299
    %v301 = vmul.f32 %v282, %v294
    %v302 = vadd.f32 %v300, %v301
    %v304 = vrot.slane %v294, 4
    %v306 = vmul.f32 %v41, %v304
    %v307 = vadd.f32 %v302, %v306
    %308 = vst [vmem:[#allocation7] sm:$0x1] %v307
    %v309 = vrot.slane %v293, 1
    %v311 = vmul.f32 %v280, %v309
    %v312 = vrot.slane %v293, 5
    %v314 = vmul.f32 %v281, %v312
    %v315 = vadd.f32 %v311, %v314
    %v316 = vrot.slane %v294, 1
    %v318 = vmul.f32 %v282, %v316
    %v319 = vadd.f32 %v315, %v318
    %v320 = vrot.slane %v294, 5
    %v322 = vmul.f32 %v41, %v320
    %v323 = vadd.f32 %v319, %v322
    %324 = vst [vmem:[#allocation7 + $0x1] sm:$0x1] %v323
    %v325 = vrot.slane %v293, 2
    %v327 = vmul.f32 %v280, %v325
    %v328 = vrot.slane %v293, 6
    %v330 = vmul.f32 %v281, %v328
    %v331 = vadd.f32 %v327, %v330
    %v332 = vrot.slane %v294, 2
    %v334 = vmul.f32 %v282, %v332
    %v335 = vadd.f32 %v331, %v334
    %v336 = vrot.slane %v294, 6
    %v338 = vmul.f32 %v41, %v336
    %v339 = vadd.f32 %v335, %v338
    %340 = vst [vmem:[#allocation7 + $0x2] sm:$0x1] %v339
    %v341 = vrot.slane %v293, 3
    %v343 = vmul.f32 %v280, %v341
    %v344 = vrot.slane %v293, 7
    %v346 = vmul.f32 %v281, %v344
    %v347 = vadd.f32 %v343, %v346
    %v348 = vrot.slane %v294, 3
    %v350 = vmul.f32 %v282, %v348
    %v351 = vadd.f32 %v347, %v350
    %v352 = vrot.slane %v294, 7
    %v354 = vmul.f32 %v41, %v352
    %v355 = vadd.f32 %v351, %v354
    %356 = vst [vmem:[#allocation7 + $0x3] sm:$0x1] %v355
    %v357 = vmul.f32 %v283, %v293
    %v358 = vmul.f32 %v286, %v297
    %v359 = vadd.f32 %v357, %v358
    %v360 = vmul.f32 %v287, %v294
    %v361 = vadd.f32 %v359, %v360
    %v362 = vmul.f32 %v42, %v304
    %v363 = vadd.f32 %v361, %v362
    %364 = vst [vmem:[#allocation7 + $0x4] sm:$0x1] %v363
    %v365 = vmul.f32 %v283, %v309
    %v366 = vmul.f32 %v286, %v312
    %v367 = vadd.f32 %v365, %v366
    %v368 = vmul.f32 %v287, %v316
    %v369 = vadd.f32 %v367, %v368
    %v370 = vmul.f32 %v42, %v320
    %v371 = vadd.f32 %v369, %v370
    %372 = vst [vmem:[#allocation7 + $0x5] sm:$0x1] %v371
    %v373 = vmul.f32 %v283, %v325
    %v374 = vmul.f32 %v286, %v328
    %v375 = vadd.f32 %v373, %v374
    %v376 = vmul.f32 %v287, %v332
    %v377 = vadd.f32 %v375, %v376
    %v378 = vmul.f32 %v42, %v336
    %v379 = vadd.f32 %v377, %v378
    %380 = vst [vmem:[#allocation7 + $0x6] sm:$0x1] %v379
    %v381 = vmul.f32 %v283, %v341
    %v382 = vmul.f32 %v286, %v344
    %v383 = vadd.f32 %v381, %v382
    %v384 = vmul.f32 %v287, %v348
    %v385 = vadd.f32 %v383, %v384
    %v386 = vmul.f32 %v42, %v352
    %v387 = vadd.f32 %v385, %v386
    %388 = vst [vmem:[#allocation7 + $0x7] sm:$0x1] %v387
    %v389 = vmul.f32 %v288, %v293
    %v390 = vmul.f32 %v289, %v297
    %v391 = vadd.f32 %v389, %v390
    %v392 = vmul.f32 %v292, %v294
    %v393 = vadd.f32 %v391, %v392
    %v394 = vmul.f32 %v43, %v304
    %v395 = vadd.f32 %v393, %v394
    %396 = vst [vmem:[#allocation7 + $0x8] sm:$0x1] %v395
    %v397 = vmul.f32 %v288, %v309
    %v398 = vmul.f32 %v289, %v312
    %v399 = vadd.f32 %v397, %v398
    %v400 = vmul.f32 %v292, %v316
    %v401 = vadd.f32 %v399, %v400
    %v402 = vmul.f32 %v43, %v320
    %v403 = vadd.f32 %v401, %v402
    %404 = vst [vmem:[#allocation7 + $0x9] sm:$0x1] %v403
    %v405 = vmul.f32 %v288, %v325
    %v406 = vmul.f32 %v289, %v328
    %v407 = vadd.f32 %v405, %v406
    %v408 = vmul.f32 %v292, %v332
    %v409 = vadd.f32 %v407, %v408
    %v410 = vmul.f32 %v43, %v336
    %v411 = vadd.f32 %v409, %v410
    %412 = vst [vmem:[#allocation7 + $0xa] sm:$0x1] %v411
    %v413 = vmul.f32 %v288, %v341
    %v414 = vmul.f32 %v289, %v344
    %v415 = vadd.f32 %v413, %v414
    %v416 = vmul.f32 %v292, %v348
    %v417 = vadd.f32 %v415, %v416
    %v418 = vmul.f32 %v43, %v352
    %v419 = vadd.f32 %v417, %v418
    %420 = vst [vmem:[#allocation7 + $0xb] sm:$0x1] %v419
    %421 = vst [vmem:[#allocation7 + $0x8] sm:$0xf0] %v294
    // Predicated region
    $region18: #{tpu_custom_call.1} parent=1 // pred_check
      _
    $region19: #{tpu_custom_call.1} parent=1 // pred_check_branch
      %423 = sbr.rel (0) target = $region21
    $region20: #{tpu_custom_call.1} parent=1 // pred_region
      %s425 = ssub.s32 256, 256
      %426 = vsyncadd [#allocation4], %s425
      %s427 = sshll.u32 [#allocation7], 4
      %s428 = int_to_ptr.vmem [resolvable:$true] %s427
      %433 = dma.vmem_to_hbm [thread:$0]  %s428, 256, %s2, [#allocation4], 128, 128, 8
    $region21: #{tpu_custom_call.1} parent=1 // pred_fallthru
      _
    // Predicated region
    $region22: #{tpu_custom_call.1} parent=1 // pred_check
      _
    $region23: #{tpu_custom_call.1} parent=1 // pred_check_branch
      %435 = sbr.rel (0) target = $region25
    $region24: #{tpu_custom_call.1} parent=1 // pred_region
      %436 = dma.done [#allocation4], 256
    $region25: #{tpu_custom_call.1} parent=1 // pred_fallthru
      _
    %437 = vsyncpa [#allocation3], 1
    %438 = vsyncpa [#allocation6], 1
    %439 = vsyncpa [#allocation4], 1

</llo_original>
